<compile_context>
chip_gen: v7x
topology: tpu7x:2x2x1
jax: 0.10.0
libtpu: 0.0.40
codegen_flags: <defaults>
</compile_context>

<pallas_src>
import functools

import jax
import jax.numpy as jnp
from jax.experimental import pallas as pl
from jax.experimental.pallas import tpu as pltpu


_SMALL_INPUT_BYTES = 512 * 1024  # below this, a fused XLA reduce beats pallas_call overhead


def _round_up8(n):
    return ((n + 7) // 8) * 8


# ----------------------------------------------------------------------------- kernels


def _avg_kernel_flat(x_ref, o_ref, acc_ref, *, ts, f, inv_s):
    """Lane-dense path. x_ref: (TB, TS*F) flattened block; o_ref: (TB, F); acc: (TB, F) f32.

    Grid = (batch_blocks, segment_blocks); the segment axis is a reduction
    ("arbitrary"), accumulated in the f32 VMEM scratch.
    """
    s_idx = pl.program_id(1)

    @pl.when(s_idx == 0)
    def _init():
        acc_ref[...] = jnp.zeros_like(acc_ref)

    acc = acc_ref[...]
    for j in range(ts):  # static unroll: TS-1 plain VPU adds, no XLU sublane reduce
        acc = acc + x_ref[:, j * f:(j + 1) * f].astype(jnp.float32)
    acc_ref[...] = acc

    @pl.when(s_idx == pl.num_programs(1) - 1)
    def _finalize():
        o_ref[...] = (acc_ref[...] * inv_s).astype(o_ref.dtype)


def _avg_kernel_3d(x_ref, o_ref, *, inv_s):
    """Generic path (F % 128 != 0). x_ref: (TB, S, F); o_ref: (TB, F)."""
    acc = jnp.sum(x_ref[...], axis=1, dtype=jnp.float32)
    o_ref[...] = (acc * inv_s).astype(o_ref.dtype)


# ----------------------------------------------------------------------------- planning


def _plan_blocks(B, S, F, itemsize, lane_dense, block_b, block_s,
                 target_tile_bytes, max_tile_bytes):
    """Pick (batch_block, segment_block) sizes.

    Constraints:
      * batch block: multiple of 8 unless it covers the whole batch (the 2-D output
        block (TB, F) must be sublane-dense when partial).
      * segment block: must divide S exactly (partial segment blocks would feed
        out-of-bounds garbage into the accumulator); only used on the lane-dense path.
      * ~target_tile_bytes per input tile, capped at max_tile_bytes; on big inputs keep
        >= 2 batch blocks so v7x's second TensorCore gets work ("parallel" axis).
    """
    row_bytes = S * F * itemsize
    total_bytes = B * row_bytes

    # --- batch block ---
    if block_b is None:
        tb = max(1, target_tile_bytes // row_bytes)
        if tb >= B:
            tb = B
            # Megacore: on large inputs don't collapse to a single grid step.
            if B >= 16 and total_bytes >= (4 << 20):
                tb = min(B, _round_up8(pl.cdiv(B, 2)))
        else:
            tb = max(8, (tb // 8) * 8)
    else:
        tb = block_b
    tb = min(tb, B)
    if tb < B:
        tb = max(8, (tb // 8) * 8)
        tb = min(tb, B)

    # --- segment block (lane-dense path only) ---
    if block_s is not None:
        if S % block_s != 0:
            raise ValueError("block_s must divide the number of segments")
        if not lane_dense and block_s != S:
            raise ValueError("block_s != S requires F % 128 == 0 (lane-dense path)")
        ts = block_s
    else:
        ts = S
        if lane_dense and tb * S * F * itemsize > max_tile_bytes:
            want = max(1, max_tile_bytes // max(1, tb * F * itemsize))
            ts = 1
            for d in range(1, S + 1):       # largest divisor of S not exceeding the budget
                if S % d == 0 and d <= want:
                    ts = d
    return tb, ts


# ----------------------------------------------------------------------------- wrapper


def consensus_avg(x, *, block_b=None, block_s=None, force_pallas=False,
                  target_tile_bytes=4 << 20, max_tile_bytes=8 << 20):
    """Mean over axis=1 with keepdim, computed with a Pallas TPU kernel.

    x: (B, S, F) -> (B, 1, F)
    """
    B, S, F = x.shape
    itemsize = jnp.dtype(x.dtype).itemsize
    total_bytes = B * S * F * itemsize

    # Small-input fallback: launch + pipeline prologue/epilogue dominate tiny inputs.
    if not force_pallas and total_bytes < _SMALL_INPUT_BYTES:
        return jnp.mean(x, axis=1, keepdims=True)

    lane_dense = (F % 128 == 0)
    tb, ts = _plan_blocks(B, S, F, itemsize, lane_dense, block_b, block_s,
                          target_tile_bytes, max_tile_bytes)
    ns = S // ts

    # Right-size the scoped-VMEM limit from the actual footprint (double-buffered in/out
    # + f32 accumulator), with headroom; capped at 40 MiB to stay safe on v7x (64 MiB).
    tile_in = tb * ts * F * itemsize
    tile_out = tb * F * itemsize
    acc_bytes = tb * F * 4
    needed = 2 * tile_in + 2 * tile_out + acc_bytes
    if needed > (40 << 20):
        # TODO(synk): S-split for the non-lane-dense 3-D path (needs ts % 8 == 0 and ts | S);
        # until then, pathological huge rows with F % 128 != 0 use the XLA reduction.
        return jnp.mean(x, axis=1, keepdims=True)
    vmem_limit = int(min(40 << 20, max(16 << 20, needed * 3 // 2 + (1 << 20))))

    cost = pl.CostEstimate(
        flops=B * S * F,
        transcendentals=0,
        bytes_accessed=(B * S * F + B * F) * itemsize,
    )
    inv_s = 1.0 / float(S)

    if lane_dense:
        # Flatten so TB sits on sublanes (always dense) and segments become static
        # lane-slices; the reduce is plain VPU adds and stores are unmasked vst.
        x_flat = x.reshape(B, S * F)
        kernel = functools.partial(_avg_kernel_flat, ts=ts, f=F, inv_s=inv_s)
        out = pl.pallas_call(
            kernel,
            out_shape=jax.ShapeDtypeStruct((B, F), x.dtype),
            grid_spec=pltpu.PrefetchScalarGridSpec(
                num_scalar_prefetch=0,
                grid=(pl.cdiv(B, tb), ns),
                in_specs=[pl.BlockSpec((tb, ts * F), lambda b, s: (b, s))],
                out_specs=pl.BlockSpec((tb, F), lambda b, s: (b, 0)),
                scratch_shapes=[pltpu.VMEM((tb, F), jnp.float32)],
            ),
            compiler_params=pltpu.CompilerParams(
                dimension_semantics=("parallel", "arbitrary"),
                vmem_limit_bytes=vmem_limit,
            ),
            cost_estimate=cost,
        )(x_flat)
    else:
        kernel = functools.partial(_avg_kernel_3d, inv_s=inv_s)
        out = pl.pallas_call(
            kernel,
            out_shape=jax.ShapeDtypeStruct((B, F), x.dtype),
            grid_spec=pltpu.PrefetchScalarGridSpec(
                num_scalar_prefetch=0,
                grid=(pl.cdiv(B, tb),),
                in_specs=[pl.BlockSpec((tb, S, F), lambda b: (b, 0, 0))],
                out_specs=pl.BlockSpec((tb, F), lambda b: (b, 0)),
            ),
            compiler_params=pltpu.CompilerParams(
                dimension_semantics=("parallel",),
                vmem_limit_bytes=vmem_limit,
            ),
            cost_estimate=cost,
        )(x)

    # Restore the keepdim axis outside the kernel (free layout plumbing).
    return out.reshape(B, 1, F)


class ConsensusModule:
    """JAX/Pallas port of the PyTorch ConsensusModule.

    The reference SegmentConsensus.forward unconditionally computes
    input.mean(dim=1, keepdim=True) regardless of consensus_type ('rnn' is merely
    renamed to 'identity', as in the reference), so this port does the same to keep
    the literal forward-pass semantics.
    """

    def __init__(self, consensus_type="avg", dim=1):
        self.consensus_type = consensus_type if consensus_type != "rnn" else "identity"
        self.dim = dim
        assert dim == 1, "ConsensusModule kernel implemented for dim=1 (as in the reference)"

    def __call__(self, x):
        return consensus_avg(x)


if __name__ == "__main__":
    key = jax.random.PRNGKey(0)
    k1, k2, k3 = jax.random.split(key, 3)

    # Case 1: typical TSN consensus shape (batch=2, segments=8, classes=32).
    # Default module path -> small-input jnp.mean fallback; also force the Pallas
    # 3-D kernel path (F % 128 != 0) and check both against the reference.
    x1 = jax.random.normal(k1, (2, 8, 32), dtype=jnp.float32)
    mod = ConsensusModule("avg", dim=1)
    ref1 = jnp.mean(x1, axis=1, keepdims=True)
    out1 = jax.block_until_ready(mod(x1))
    out1_k = jax.block_until_ready(consensus_avg(x1, force_pallas=True))
    assert out1.shape == (2, 1, 32) and out1_k.shape == (2, 1, 32)
    assert jnp.allclose(out1, ref1, atol=1e-5, rtol=1e-5), "avg (fallback) mismatch"
    assert jnp.allclose(out1_k, ref1, atol=1e-5, rtol=1e-5), "avg (3-D kernel) mismatch"

    # Case 2: lane-dense path (F % 128 == 0) with a blocked batch grid (2 grid steps).
    x2 = jax.random.normal(k2, (16, 8, 128), dtype=jnp.float32)
    out2 = jax.block_until_ready(consensus_avg(x2, block_b=8, force_pallas=True))
    ref2 = jnp.mean(x2, axis=1, keepdims=True)
    assert out2.shape == (16, 1, 128), out2.shape
    assert jnp.allclose(out2, ref2, atol=1e-5, rtol=1e-5), "avg (lane-dense) mismatch"

    # Case 3: S-split accumulator path (second grid axis over segments, pl.when
    # init/finalize across the 'arbitrary' reduction axis).
    x3 = jax.random.normal(k3, (8, 4, 256), dtype=jnp.float32)
    out3 = jax.block_until_ready(consensus_avg(x3, block_s=2, force_pallas=True))
    ref3 = jnp.mean(x3, axis=1, keepdims=True)
    assert out3.shape == (8, 1, 256), out3.shape
    assert jnp.allclose(out3, ref3, atol=1e-5, rtol=1e-5), "avg (S-split) mismatch"

    # 'identity' / 'rnn' use the same literal reference forward (mean over dim=1).
    mod_id = ConsensusModule("rnn", dim=1)
    out_id = jax.block_until_ready(mod_id(x1))
    assert jnp.allclose(out_id, ref1, atol=1e-5, rtol=1e-5), "identity/rnn forward mismatch"

    print("KERNEL_OK")
</pallas_src>

<mosaic_0001>
module attributes {stable_mosaic.version = 11 : i64} {
  func.func @_avg_kernel_3d(%arg0: i32, %arg1: memref<2x8x32xf32, #tpu.memory_space<vmem>>, %arg2: memref<2x32xf32, #tpu.memory_space<vmem>>) attributes {dimension_semantics = [#tpu.dimension_semantics<parallel>], iteration_bounds = array<i64: 1>, scalar_prefetch = 0 : i64, scratch_operands = 0 : i64, tpu.core_type = #tpu.core_type<tc>, window_params = [{transform_indices = @transform_0, window_bounds = array<i64: 2, 8, 32>}, {transform_indices = @transform_1, window_bounds = array<i64: 2, 32>}]} {
    %c0 = arith.constant 0 : index
    %c0_0 = arith.constant 0 : index
    %c0_1 = arith.constant 0 : index
    %0 = vector.load %arg1[%c0, %c0_0, %c0_1] : memref<2x8x32xf32, #tpu.memory_space<vmem>>, vector<2x8x32xf32>
    %cst = arith.constant dense<0.000000e+00> : vector<2x32xf32>
    %1 = vector.multi_reduction <add>, %0, %cst [1] : vector<2x8x32xf32> to vector<2x32xf32>
    %cst_2 = arith.constant 1.250000e-01 : f32
    %2 = vector.broadcast %cst_2 : f32 to vector<2x32xf32>
    %3 = arith.mulf %1, %2 : vector<2x32xf32>
    %c0_3 = arith.constant 0 : index
    %c0_4 = arith.constant 0 : index
    %4 = vector.load %arg2[%c0_3, %c0_4] : memref<2x32xf32, #tpu.memory_space<vmem>>, vector<2x32xf32>
    tpu.vector_store %arg2[%c0_3, %c0_4], %3 {strides = array<i32>} : memref<2x32xf32, #tpu.memory_space<vmem>>, vector<2x32xf32>,
    return
  }
  func.func @transform_0(%arg0: i32) -> (i32, i32, i32) {
    %c0_i32 = arith.constant 0 : i32
    %c0_i32_0 = arith.constant 0 : i32
    %c0_i32_1 = arith.constant 0 : i32
    return %arg0, %c0_i32, %c0_i32_0 : i32, i32, i32
  }
  func.func @transform_1(%arg0: i32) -> (i32, i32) {
    %c0_i32 = arith.constant 0 : i32
    %c0_i32_0 = arith.constant 0 : i32
    return %arg0, %c0_i32 : i32, i32
  }
}

</mosaic_0001>

<llo_original>
// kernel: tpu_custom_call.1
$region0: #{tpu_custom_call.1}
  #allocation0 [shape = 'u32[]', space=smem, size = 0x4, offset = 0x4, fixed_abs, tag = 'smem constant byte address 0x4 - core index']
  #allocation1 [shape = 'u32[144,128]{1,0:T(1,128)}', space=vmem, size = 0x12000, scoped, tag = 'internal scratch']
  %s0 = inlined_call_operand.hbm [shape: f32[2,8,32], index: 0, kind: input, shape index: {}]
  %s1 = inlined_call_operand.hbm [shape: f32[2,32], index: 1, kind: output, shape index: {}]
  %s2 = sld [smem:[#allocation0]]
  $region18: #{tpu_custom_call.1} parent=0
    _
  %s4 = ssub.s32 1, %s2
  %s5 = scalar_select 0, %s4, %s2
  $region1: #{tpu_custom_call.1} parent=0
    #allocation2 [shape = 'u8[8192]{0}', space=vmem, size = 0x2000, scoped, tag = 'input window, operand 0, single buffered']
    #allocation3 [shape = 's32[1]{0}', space=sflag, size = 0x4, scoped, tag = 'scoped memory for tpu_custom_call.1']
    #allocation4 [shape = 's32[1]{0}', space=sflag, size = 0x4, scoped, tag = 'scoped memory for tpu_custom_call.1']
    #allocation5 [shape = 'u8[1024]{0}', space=vmem, size = 0x400, scoped, tag = 'output window, operand 0, single buffered']
    %6 = vsyncpa [#allocation3], 0
    %7 = vsyncpa [#allocation4], 0
    // Predicated region
    $region2: #{tpu_custom_call.1} parent=1 // pred_check
      _
    $region3: #{tpu_custom_call.1} parent=1 // pred_check_branch
      %9 = sbr.rel (0) target = $region5
    $region4: #{tpu_custom_call.1} parent=1 // pred_region
      %s11 = ssub.s32 256, 256
      %12 = vsyncadd [#allocation3], %s11
      %s13 = sshll.u32 [#allocation2], 4
      %s14 = int_to_ptr.vmem [resolvable:$true] %s13
      %19 = dma.hbm_to_vmem [thread:$0]  %s0, 256, %s14, [#allocation3], 128, 128, 8
    $region5: #{tpu_custom_call.1} parent=1 // pred_fallthru
      _
    // Predicated region
    $region6: #{tpu_custom_call.1} parent=1 // pred_check
      _
    $region7: #{tpu_custom_call.1} parent=1 // pred_check_branch
      %21 = sbr.rel (0) target = $region9
    $region8: #{tpu_custom_call.1} parent=1 // pred_region
      %22 = dma.done [#allocation3], 256
    $region9: #{tpu_custom_call.1} parent=1 // pred_fallthru
      _
    %v23 = vld [vmem:[#allocation2] sm:$0xff]
    %v24 = vld [vmem:[#allocation2 + $0x8] sm:$0xff]
    %vm25 = vcmask 261120
    %v26 = vsel %vm25, %v23, 0.0
    %v27 = vrot.slane %v26, 4
    %v28 = vadd.f32 %v26, %v27
    %v29 = vrot.slane %v28, 2
    %v30 = vadd.f32 %v28, %v29
    %v31 = vrot.slane %v30, 1
    %v32 = vadd.f32 %v30, %v31
    %v33 = vsel %vm25, %v24, 0.0
    %v34 = vrot.slane %v33, 4
    %v35 = vadd.f32 %v33, %v34
    %v36 = vrot.slane %v35, 2
    %v37 = vadd.f32 %v35, %v36
    %v38 = vrot.slane %v37, 1
    %v39 = vadd.f32 %v37, %v38
    %v40 = vmul.f32 %v32, 0.125
    %v41 = vmul.f32 %v39, 0.125
    %vm44 = vcmask 1041409
    %v45 = vsel %vm44, %v41, %v40
    %vm47 = vcmask 254976
    %48 = vst.msk [vmem:[#allocation5] sm:$0x3] %vm47, %v45
    // Predicated region
    $region10: #{tpu_custom_call.1} parent=1 // pred_check
      _
    $region11: #{tpu_custom_call.1} parent=1 // pred_check_branch
      %50 = sbr.rel (0) target = $region13
    $region12: #{tpu_custom_call.1} parent=1 // pred_region
      %s52 = ssub.s32 32, 32
      %53 = vsyncadd [#allocation4], %s52
      %s55 = sshll.u32 [#allocation5], 4
      %s56 = int_to_ptr.vmem [resolvable:$true] %s55
      %58 = dma.vmem_to_hbm [thread:$0]  %s56, 32, %s1, [#allocation4]
    $region13: #{tpu_custom_call.1} parent=1 // pred_fallthru
      _
    // Predicated region
    $region14: #{tpu_custom_call.1} parent=1 // pred_check
      _
    $region15: #{tpu_custom_call.1} parent=1 // pred_check_branch
      %60 = sbr.rel (0) target = $region17
    $region16: #{tpu_custom_call.1} parent=1 // pred_region
      %61 = dma.done [#allocation4], 32
    $region17: #{tpu_custom_call.1} parent=1 // pred_fallthru
      _
    %62 = vsyncpa [#allocation3], 1
    %63 = vsyncpa [#allocation4], 1

</llo_original>
